<compile_context>
chip_gen: v5e
topology: v5e:2x2
jax: 0.10.0
libtpu: 0.0.40
codegen_flags: <defaults>
</compile_context>

<pallas_src>
import functools

import jax
import jax.numpy as jnp
import numpy as np
from jax.experimental import pallas as pl
from jax.experimental.pallas import tpu as pltpu


# ----------------------------------------------------------------------------
# Buffer setup (plain JAX glue — same math as the torch constructor)
# ----------------------------------------------------------------------------
def make_positional_encoding(d_model: int, max_len: int = 5000) -> jnp.ndarray:
    position = np.arange(0, max_len, dtype=np.float32)[:, None]               # (L, 1)
    div_term = np.exp(
        np.arange(0, d_model, 2, dtype=np.float32) * (-np.log(10000.0) / d_model)
    )                                                                          # (D/2,)
    pe = np.zeros((max_len, d_model), dtype=np.float32)
    pe[:, 0::2] = np.sin(position * div_term)
    pe[:, 1::2] = np.cos(position * div_term)
    return jnp.asarray(pe)


# ----------------------------------------------------------------------------
# Pallas kernels (elementwise; pe block broadcasts over the row-tile axis)
# ----------------------------------------------------------------------------
def _add_pe_kernel(x_ref, pe_ref, o_ref):
    # x_ref: (TB, TC)   pe_ref: (1, TC)   o_ref: (TB, TC)
    o_ref[...] = x_ref[...] + pe_ref[...]


def _add_pe_dropout_kernel(x_ref, pe_ref, m_ref, o_ref):
    # m_ref holds 0 or 1/keep_prob (inverted-dropout scale), same tiling as x.
    o_ref[...] = (x_ref[...] + pe_ref[...]) * m_ref[...]


# ----------------------------------------------------------------------------
# Tile sizing: lane-dense columns, ~2 MiB blocks, sublane-aligned rows
# ----------------------------------------------------------------------------
_LANE = 128


def _choose_tiles(num_rows: int, num_cols: int, itemsize: int,
                  target_block_bytes: int = 2 * 1024 * 1024):
    # Column (lane) tile: whole flattened row if small, else a big 128-multiple.
    if num_cols <= 4096:
        tc = num_cols                                     # == full dim (always legal)
    else:
        tc = min(num_cols // _LANE, 8192 // _LANE) * _LANE
    # Row (sublane) tile: fill ~target_block_bytes; keep well under the scoped
    # VMEM limit even with double-buffered x/out/mask (v7x has only 64 MiB).
    sublane = max(8, 32 // itemsize)                      # 8 for f32, 16 for bf16
    rows_target = max(1, target_block_bytes // (tc * itemsize))
    if rows_target >= num_rows:
        tb = num_rows                                     # == full dim (always legal)
    else:
        tb = max(sublane, (rows_target // sublane) * sublane)
        tb = min(tb, num_rows)
    return tb, tc


# ----------------------------------------------------------------------------
# Forward: out = dropout(x + pe[:S])   (dropout only when training=True)
# ----------------------------------------------------------------------------
def positional_encoding_forward(x: jnp.ndarray,
                                pe_table: jnp.ndarray,
                                *,
                                p: float = 0.1,
                                training: bool = False,
                                rng_key=None) -> jnp.ndarray:
    """x: (B, S, D), pe_table: (max_len, D).  Returns (B, S, D)."""
    B, S, D = x.shape
    cols = S * D
    itemsize = jnp.dtype(x.dtype).itemsize

    # Flatten so the lane axis is S*D (lane-dense even when D < 128).
    x2 = x.reshape(B, cols)
    pe2 = pe_table[:S, :].astype(x.dtype).reshape(1, cols)   # == pe[:x.size(1)]

    tb, tc = _choose_tiles(B, cols, itemsize)
    grid = (pl.cdiv(B, tb), pl.cdiv(cols, tc))

    row_spec = pl.BlockSpec((tb, tc), lambda i, j: (i, j))   # x / out / mask
    pe_spec = pl.BlockSpec((1, tc), lambda i, j: (0, j))     # broadcast over rows

    compiler_params = pltpu.CompilerParams(
        dimension_semantics=("parallel", "parallel"),        # lets v7x use both TCs
    )

    use_dropout = training and p > 0.0
    if use_dropout:
        if rng_key is None:
            rng_key = jax.random.PRNGKey(0)
        keep_prob = 1.0 - p
        keep = jax.random.bernoulli(rng_key, keep_prob, (B, cols))
        mask = keep.astype(x.dtype) * jnp.asarray(1.0 / keep_prob, dtype=x.dtype)

        cost = pl.CostEstimate(
            flops=2 * B * cols, transcendentals=0,
            bytes_accessed=(3 * B * cols + cols) * itemsize)
        out2 = pl.pallas_call(
            _add_pe_dropout_kernel,
            out_shape=jax.ShapeDtypeStruct((B, cols), x.dtype),
            grid=grid,
            in_specs=[row_spec, pe_spec, row_spec],
            out_specs=row_spec,
            compiler_params=compiler_params,
            cost_estimate=cost,
        )(x2, pe2, mask)
    else:
        cost = pl.CostEstimate(
            flops=B * cols, transcendentals=0,
            bytes_accessed=(2 * B * cols + cols) * itemsize)
        out2 = pl.pallas_call(
            _add_pe_kernel,
            out_shape=jax.ShapeDtypeStruct((B, cols), x.dtype),
            grid=grid,
            in_specs=[row_spec, pe_spec],
            out_specs=row_spec,
            compiler_params=compiler_params,
            cost_estimate=cost,
        )(x2, pe2)

    return out2.reshape(B, S, D)


# ----------------------------------------------------------------------------
# Main: deterministic inputs, run once, verify, print KERNEL_OK
# ----------------------------------------------------------------------------
if __name__ == "__main__":
    B, S, D = 2, 8, 32          # batch=2, seq=8, d_model=32
    max_len = 64

    key = jax.random.PRNGKey(0)
    x = jax.random.normal(key, (B, S, D), dtype=jnp.float32)
    pe_table = make_positional_encoding(D, max_len=max_len)

    # Reference for the eval-mode path (dropout is identity in eval).
    ref = x + pe_table[:S, :][None, :, :]

    # Eval-mode forward — the hot inference path.
    out = positional_encoding_forward(x, pe_table, p=0.1, training=False)
    out = jax.block_until_ready(out)
    np.testing.assert_allclose(np.asarray(out), np.asarray(ref),
                               rtol=1e-6, atol=1e-6)

    # Training-mode forward (inverted dropout).  RNG stream differs from torch,
    # so only structural checks: shape, and every element is either 0 or a
    # correctly rescaled (x + pe) value.
    out_train = positional_encoding_forward(
        x, pe_table, p=0.1, training=True, rng_key=jax.random.PRNGKey(123))
    out_train = jax.block_until_ready(out_train)
    assert out_train.shape == (B, S, D)
    ot = np.asarray(out_train)
    scaled_ref = np.asarray(ref) / 0.9
    ok = np.isclose(ot, 0.0, atol=1e-6) | np.isclose(ot, scaled_ref, rtol=1e-5, atol=1e-6)
    assert bool(np.all(ok))

    print("KERNEL_OK")
</pallas_src>

<mosaic_0001>
module attributes {stable_mosaic.version = 11 : i64} {
  func.func @_add_pe_kernel(%arg0: i32, %arg1: i32, %arg2: memref<2x256xf32, #tpu.memory_space<vmem>>, %arg3: memref<1x256xf32, #tpu.memory_space<vmem>>, %arg4: memref<2x256xf32, #tpu.memory_space<vmem>>) attributes {dimension_semantics = [#tpu.dimension_semantics<parallel>, #tpu.dimension_semantics<parallel>], iteration_bounds = array<i64: 1, 1>, scalar_prefetch = 0 : i64, scratch_operands = 0 : i64, tpu.core_type = #tpu.core_type<tc>, window_params = [{transform_indices = @transform_0, window_bounds = array<i64: 2, 256>}, {transform_indices = @transform_1, window_bounds = array<i64: 1, 256>}, {transform_indices = @transform_2, window_bounds = array<i64: 2, 256>}]} {
    %c0 = arith.constant 0 : index
    %c0_0 = arith.constant 0 : index
    %0 = vector.load %arg2[%c0, %c0_0] : memref<2x256xf32, #tpu.memory_space<vmem>>, vector<2x256xf32>
    %c0_1 = arith.constant 0 : index
    %c0_2 = arith.constant 0 : index
    %1 = vector.load %arg3[%c0_1, %c0_2] : memref<1x256xf32, #tpu.memory_space<vmem>>, vector<1x256xf32>
    %2 = vector.broadcast %1 : vector<1x256xf32> to vector<2x256xf32>
    %3 = arith.addf %0, %2 : vector<2x256xf32>
    %c0_3 = arith.constant 0 : index
    %c0_4 = arith.constant 0 : index
    %4 = vector.load %arg4[%c0_3, %c0_4] : memref<2x256xf32, #tpu.memory_space<vmem>>, vector<2x256xf32>
    tpu.vector_store %arg4[%c0_3, %c0_4], %3 {strides = array<i32>} : memref<2x256xf32, #tpu.memory_space<vmem>>, vector<2x256xf32>,
    return
  }
  func.func @transform_0(%arg0: i32, %arg1: i32) -> (i32, i32) {
    %c0_i32 = arith.constant 0 : i32
    return %arg0, %arg1 : i32, i32
  }
  func.func @transform_1(%arg0: i32, %arg1: i32) -> (i32, i32) {
    %c0_i32 = arith.constant 0 : i32
    %c0_i32_0 = arith.constant 0 : i32
    return %c0_i32, %arg1 : i32, i32
  }
  func.func @transform_2(%arg0: i32, %arg1: i32) -> (i32, i32) {
    %c0_i32 = arith.constant 0 : i32
    return %arg0, %arg1 : i32, i32
  }
}

</mosaic_0001>

<llo_original>
// kernel: tpu_custom_call.1
$region0: #{tpu_custom_call.1}
  #allocation0 [shape = 'u32[]', space=smem, size = 0x4, offset = 0x4, fixed_abs, tag = 'smem constant byte address 0x4 - core index']
  #allocation1 [shape = 'u32[72,128]{1,0:T(1,128)}', space=vmem, size = 0x9000, scoped, tag = 'internal scratch']
  %s0 = inlined_call_operand.hbm [shape: f32[2,256], index: 0, kind: input, shape index: {}]
  %s1 = inlined_call_operand.hbm [shape: f32[1,256], index: 1, kind: input, shape index: {}]
  %s2 = inlined_call_operand.hbm [shape: f32[2,256], index: 2, kind: output, shape index: {}]
  %s3 = sld [smem:[#allocation0]]
  $region26: #{tpu_custom_call.1} parent=0
    _
  %s5 = ssub.s32 1, %s3
  %s6 = scalar_select 0, %s5, %s3
  $region1: #{tpu_custom_call.1} parent=0
    #allocation2 [shape = 'u8[2048]{0}', space=vmem, size = 0x800, scoped, tag = 'input window, operand 0, single buffered']
    #allocation3 [shape = 's32[1]{0}', space=sflag, size = 0x4, scoped, tag = 'scoped memory for tpu_custom_call.1']
    #allocation4 [shape = 's32[1]{0}', space=sflag, size = 0x4, scoped, tag = 'scoped memory for tpu_custom_call.1']
    #allocation5 [shape = 'u8[1024]{0}', space=vmem, size = 0x400, scoped, tag = 'input window, operand 1, single buffered']
    #allocation6 [shape = 's32[1]{0}', space=sflag, size = 0x4, scoped, tag = 'scoped memory for tpu_custom_call.1']
    #allocation7 [shape = 'u8[2048]{0}', space=vmem, size = 0x800, scoped, tag = 'output window, operand 0, single buffered']
    %7 = vsyncpa [#allocation3], 0
    %8 = vsyncpa [#allocation6], 0
    %9 = vsyncpa [#allocation4], 0
    // Predicated region
    $region2: #{tpu_custom_call.1} parent=1 // pred_check
      _
    $region3: #{tpu_custom_call.1} parent=1 // pred_check_branch
      %11 = sbr.rel (0) target = $region5
    $region4: #{tpu_custom_call.1} parent=1 // pred_region
      %13 = vsyncadd [#allocation3], 0
      %s15 = sshll.u32 %s0, 4
      %s16 = int_to_ptr.hbm [resolvable:$true] %s15
      %s17 = sshll.u32 [#allocation2], 4
      %s18 = int_to_ptr.vmem [resolvable:$true] %s17
      %20 = dma.hbm_to_vmem [thread:$0]  %s16, 64, %s18, [#allocation3]
    $region5: #{tpu_custom_call.1} parent=1 // pred_fallthru
      _
    // Predicated region
    $region6: #{tpu_custom_call.1} parent=1 // pred_check
      _
    $region7: #{tpu_custom_call.1} parent=1 // pred_check_branch
      %22 = sbr.rel (0) target = $region9
    $region8: #{tpu_custom_call.1} parent=1 // pred_region
      %24 = vsyncadd [#allocation6], 0
      %s26 = sshll.u32 %s1, 4
      %s27 = int_to_ptr.hbm [resolvable:$true] %s26
      %s28 = sshll.u32 [#allocation5], 4
      %s29 = int_to_ptr.vmem [resolvable:$true] %s28
      %31 = dma.hbm_to_vmem [thread:$0]  %s27, 32, %s29, [#allocation6]
    $region9: #{tpu_custom_call.1} parent=1 // pred_fallthru
      _
    // Predicated region
    $region10: #{tpu_custom_call.1} parent=1 // pred_check
      _
    $region11: #{tpu_custom_call.1} parent=1 // pred_check_branch
      %33 = sbr.rel (0) target = $region13
    $region12: #{tpu_custom_call.1} parent=1 // pred_region
      %35 = dma.done [#allocation3], 64
    $region13: #{tpu_custom_call.1} parent=1 // pred_fallthru
      _
    // Predicated region
    $region14: #{tpu_custom_call.1} parent=1 // pred_check
      _
    $region15: #{tpu_custom_call.1} parent=1 // pred_check_branch
      %37 = sbr.rel (0) target = $region17
    $region16: #{tpu_custom_call.1} parent=1 // pred_region
      %39 = dma.done [#allocation6], 32
    $region17: #{tpu_custom_call.1} parent=1 // pred_fallthru
      _
    %v40 = vld [vmem:[#allocation2] sm:$0xf]
    %v41 = vld [vmem:[#allocation5] sm:$0x3]
    %v43 = vperm.slane %v41, 0
    %v44 = vperm.slane %v41, 1
    %v45 = vrot.slane %v44, 6
    %vm46 = vcmask 1041408
    %v47 = vsel %vm46, %v43, %v45
    %v49 = vadd.f32 %v40, %v47
    %50 = vst [vmem:[#allocation7] sm:$0xf] %v49
    // Predicated region
    $region18: #{tpu_custom_call.1} parent=1 // pred_check
      _
    $region19: #{tpu_custom_call.1} parent=1 // pred_check_branch
      %52 = sbr.rel (0) target = $region21
    $region20: #{tpu_custom_call.1} parent=1 // pred_region
      %54 = vsyncadd [#allocation4], 0
      %s56 = sshll.u32 [#allocation7], 4
      %s57 = int_to_ptr.vmem [resolvable:$true] %s56
      %s58 = sshll.u32 %s2, 4
      %s59 = int_to_ptr.hbm [resolvable:$true] %s58
      %61 = dma.vmem_to_hbm [thread:$0]  %s57, 64, %s59, [#allocation4]
    $region21: #{tpu_custom_call.1} parent=1 // pred_fallthru
      _
    // Predicated region
    $region22: #{tpu_custom_call.1} parent=1 // pred_check
      _
    $region23: #{tpu_custom_call.1} parent=1 // pred_check_branch
      %63 = sbr.rel (0) target = $region25
    $region24: #{tpu_custom_call.1} parent=1 // pred_region
      %65 = dma.done [#allocation4], 64
    $region25: #{tpu_custom_call.1} parent=1 // pred_fallthru
      _
    %66 = vsyncpa [#allocation3], 1
    %67 = vsyncpa [#allocation6], 1
    %68 = vsyncpa [#allocation4], 1

</llo_original>
